<compile_context>
chip_gen: v7x
topology: tpu7x:2x2x1
jax: 0.10.0
libtpu: 0.0.40
codegen_flags: <defaults>
</compile_context>

<pallas_src>
import math
import functools

import jax
import jax.numpy as jnp
from jax.experimental import pallas as pl
from jax.experimental.pallas import tpu as pltpu


def _round_up(x, m):
    return ((x + m - 1) // m) * m


def _cube_kernel(x_ref, w_ref, b_ref, o_ref):
    # Single fused MXU matmul, f32 accumulation.
    acc = jnp.dot(x_ref[...], w_ref[...], preferred_element_type=jnp.float32)
    acc = acc + b_ref[...]            # broadcast [1, TN] over the TM rows
    # Elementwise cube on the VPU, in f32, then cast to output dtype.
    o_ref[...] = (acc * acc * acc).astype(o_ref.dtype)


def prepare_cube_params(w_weight, p_weight, l_weight, bias):
    """One-time parameter prep (call OUTSIDE the per-step forward).

    Takes PyTorch-layout params (weights [out, in], bias [out]) and returns:
      w_cat  : [Kw+Kp+Kl, O_pad]  fused, transposed, lane-padded weight
      bias2d : [1, O_pad]         lane-padded bias
    where O_pad = round_up(out_features, 128) so kernel stores are lane-dense.
    """
    w_cat = jnp.concatenate(
        [jnp.asarray(w_weight), jnp.asarray(p_weight), jnp.asarray(l_weight)],
        axis=1,
    ).T                                           # [K_total, O]
    bias = jnp.asarray(bias)
    o = w_cat.shape[1]
    o_pad = _round_up(o, 128)
    if o_pad != o:
        w_cat = jnp.pad(w_cat, ((0, 0), (0, o_pad - o)))
        bias = jnp.pad(bias, (0, o_pad - o))
    bias2d = bias.reshape(1, o_pad)
    # NOTE: on v5e, casting w_cat (and the activations) to bf16 while keeping
    # preferred_element_type=f32 recovers ~3x MXU throughput; kept in f32 here
    # to exactly match the reference numerics.
    return w_cat, bias2d


@functools.partial(jax.jit, static_argnames=("out_features",))
def cube_forward(w_input, p_input, l_input, w_cat, bias2d, out_features):
    """Pallas equivalent of Cube.forward.

    w_cat / bias2d come from `prepare_cube_params` (fused + transposed +
    lane-padded, done once). Inputs are [batch, *_features].
    """
    # Fuse the three activations along the contraction axis (matches the
    # K-concatenated weight).
    x = jnp.concatenate([w_input, p_input, l_input], axis=1)   # [B, K_total]
    b, k = x.shape
    o_pad = w_cat.shape[1]

    # Tile selection: lane-dense output tiles (TN multiple of 128 dividing
    # O_pad), TM a multiple of 8. Double-buffered f32 footprint at the max
    # (256, K, 512) tiles is ~1.5 MiB -> fits every generation incl. v7x.
    if o_pad % 512 == 0:
        tn = 512
    elif o_pad % 256 == 0:
        tn = 256
    else:
        tn = 128
    tm = min(256, _round_up(b, 8))
    b_pad = _round_up(b, tm)
    if b_pad != b:
        x = jnp.pad(x, ((0, b_pad - b), (0, 0)))

    grid = (b_pad // tm, o_pad // tn)

    out = pl.pallas_call(
        _cube_kernel,
        out_shape=jax.ShapeDtypeStruct((b_pad, o_pad), w_input.dtype),
        grid=grid,
        in_specs=[
            pl.BlockSpec((tm, k), lambda i, j: (i, 0)),    # activations
            pl.BlockSpec((k, tn), lambda i, j: (0, j)),    # fused weight
            pl.BlockSpec((1, tn), lambda i, j: (0, j)),    # bias row
        ],
        out_specs=pl.BlockSpec((tm, tn), lambda i, j: (i, j)),
        compiler_params=pltpu.CompilerParams(
            dimension_semantics=("parallel", "parallel")),
    )(x, w_cat, bias2d)

    # Strip batch / lane padding back to the module's logical shape.
    return out[:b, :out_features]


def _init_params(key, w_features, p_features, l_features, out_features):
    """Deterministic re-implementation of Cube.reset_parameters."""
    kw, kp, kl, kb = jax.random.split(key, 4)
    w_stdv = 1.0 / math.sqrt(w_features)
    p_stdv = 1.0 / math.sqrt(p_features)
    l_stdv = 1.0 / math.sqrt(l_features)
    w_weight = jax.random.uniform(
        kw, (out_features, w_features), jnp.float32, -w_stdv, w_stdv)
    p_weight = jax.random.uniform(
        kp, (out_features, p_features), jnp.float32, -p_stdv, p_stdv)
    l_weight = jax.random.uniform(
        kl, (out_features, l_features), jnp.float32, -l_stdv, l_stdv)
    bias = jax.random.uniform(
        kb, (out_features,), jnp.float32, -w_stdv, w_stdv)
    return w_weight, p_weight, l_weight, bias


if __name__ == "__main__":
    key = jax.random.PRNGKey(0)
    k_params, kx_w, kx_p, kx_l = jax.random.split(key, 4)

    # Small shapes consistent with the module.
    batch = 8
    w_features, p_features, l_features, out_features = 32, 16, 24, 64

    w_weight, p_weight, l_weight, bias = _init_params(
        k_params, w_features, p_features, l_features, out_features)

    w_input = jax.random.normal(kx_w, (batch, w_features), jnp.float32)
    p_input = jax.random.normal(kx_p, (batch, p_features), jnp.float32)
    l_input = jax.random.normal(kx_l, (batch, l_features), jnp.float32)

    # One-time param prep (fuse + transpose + lane-pad), then the kernel call.
    w_cat, bias2d = prepare_cube_params(w_weight, p_weight, l_weight, bias)
    out = cube_forward(w_input, p_input, l_input, w_cat, bias2d, out_features)
    jax.block_until_ready(out)

    # Reference check in plain JAX (same semantics as the PyTorch forward).
    ref = (w_input @ w_weight.T + p_input @ p_weight.T
           + l_input @ l_weight.T + bias) ** 3
    assert out.shape == (batch, out_features)
    assert jnp.allclose(out, ref, atol=1e-4, rtol=1e-4)

    print("KERNEL_OK")
</pallas_src>

<mosaic_0001>
module attributes {stable_mosaic.version = 11 : i64} {
  func.func @_cube_kernel(%arg0: i32, %arg1: i32, %arg2: memref<8x72xf32, #tpu.memory_space<vmem>>, %arg3: memref<72x128xf32, #tpu.memory_space<vmem>>, %arg4: memref<1x128xf32, #tpu.memory_space<vmem>>, %arg5: memref<8x128xf32, #tpu.memory_space<vmem>>) attributes {dimension_semantics = [#tpu.dimension_semantics<parallel>, #tpu.dimension_semantics<parallel>], iteration_bounds = array<i64: 1, 1>, scalar_prefetch = 0 : i64, scratch_operands = 0 : i64, tpu.core_type = #tpu.core_type<tc>, window_params = [{transform_indices = @transform_0, window_bounds = array<i64: 8, 72>}, {transform_indices = @transform_1, window_bounds = array<i64: 72, 128>}, {transform_indices = @transform_2, window_bounds = array<i64: 1, 128>}, {transform_indices = @transform_3, window_bounds = array<i64: 8, 128>}]} {
    %c0 = arith.constant 0 : index
    %c0_0 = arith.constant 0 : index
    %0 = vector.load %arg2[%c0, %c0_0] : memref<8x72xf32, #tpu.memory_space<vmem>>, vector<8x72xf32>
    %c0_1 = arith.constant 0 : index
    %c0_2 = arith.constant 0 : index
    %1 = vector.load %arg3[%c0_1, %c0_2] : memref<72x128xf32, #tpu.memory_space<vmem>>, vector<72x128xf32>
    %cst = arith.constant dense<0.000000e+00> : vector<8x128xf32>
    %2 = tpu.matmul %0, %1, %cst {dimension_numbers = #tpu.dot_dimension_numbers<[1], [0], [0], [1], [0, 0, 1, 1], [], []>} : vector<8x72xf32>, vector<72x128xf32>, vector<8x128xf32> -> vector<8x128xf32>
    %c0_3 = arith.constant 0 : index
    %c0_4 = arith.constant 0 : index
    %3 = vector.load %arg4[%c0_3, %c0_4] : memref<1x128xf32, #tpu.memory_space<vmem>>, vector<1x128xf32>
    %4 = vector.broadcast %3 : vector<1x128xf32> to vector<8x128xf32>
    %5 = arith.addf %2, %4 : vector<8x128xf32>
    %6 = arith.mulf %5, %5 : vector<8x128xf32>
    %7 = arith.mulf %6, %5 : vector<8x128xf32>
    %c0_5 = arith.constant 0 : index
    %c0_6 = arith.constant 0 : index
    %8 = vector.load %arg5[%c0_5, %c0_6] : memref<8x128xf32, #tpu.memory_space<vmem>>, vector<8x128xf32>
    tpu.vector_store %arg5[%c0_5, %c0_6], %7 {strides = array<i32>} : memref<8x128xf32, #tpu.memory_space<vmem>>, vector<8x128xf32>,
    return
  }
  func.func @transform_0(%arg0: i32, %arg1: i32) -> (i32, i32) {
    %c0_i32 = arith.constant 0 : i32
    %c0_i32_0 = arith.constant 0 : i32
    return %arg0, %c0_i32 : i32, i32
  }
  func.func @transform_1(%arg0: i32, %arg1: i32) -> (i32, i32) {
    %c0_i32 = arith.constant 0 : i32
    %c0_i32_0 = arith.constant 0 : i32
    return %c0_i32, %arg1 : i32, i32
  }
  func.func @transform_2(%arg0: i32, %arg1: i32) -> (i32, i32) {
    %c0_i32 = arith.constant 0 : i32
    %c0_i32_0 = arith.constant 0 : i32
    return %c0_i32, %arg1 : i32, i32
  }
  func.func @transform_3(%arg0: i32, %arg1: i32) -> (i32, i32) {
    %c0_i32 = arith.constant 0 : i32
    return %arg0, %arg1 : i32, i32
  }
}

</mosaic_0001>

<llo_original>
// kernel: cube_forward.1
$region0: #{cube_forward.1}
  #allocation0 [shape = 'u32[]', space=smem, size = 0x4, offset = 0x4, fixed_abs, tag = 'smem constant byte address 0x4 - core index']
  #allocation1 [shape = 'u32[144,128]{1,0:T(1,128)}', space=vmem, size = 0x12000, scoped, tag = 'internal scratch']
  %s0 = inlined_call_operand.vmem [shape: f32[8,72], index: 0, kind: input, shape index: {}]
  %s1 = inlined_call_operand.hbm [shape: f32[72,128], index: 1, kind: input, shape index: {}]
  %s2 = inlined_call_operand.vmem [shape: f32[1,128], index: 2, kind: input, shape index: {}]
  %s3 = inlined_call_operand.hbm [shape: f32[8,128], index: 3, kind: output, shape index: {}]
  %s4 = sld [smem:[#allocation0]]
  $region26: #{cube_forward.1} parent=0
    _
  %s6 = ssub.s32 1, %s4
  %s7 = scalar_select 0, %s6, %s4
  $region1: #{cube_forward.1} parent=0
    #allocation2 [shape = 'u8[36864]{0}', space=vmem, size = 0x9000, scoped, tag = 'input window, operand 1, single buffered']
    #allocation3 [shape = 's32[1]{0}', space=sflag, size = 0x4, scoped, tag = 'scoped memory for cube_forward.1']
    #allocation4 [shape = 's32[1]{0}', space=sflag, size = 0x4, scoped, tag = 'scoped memory for cube_forward.1']
    #allocation5 [shape = 'u8[4096]{0}', space=vmem, size = 0x1000, scoped, tag = 'output window, operand 0, single buffered']
    %8 = vsyncpa [#allocation3], 0
    %9 = vsyncpa [#allocation4], 0
    // Predicated region
    $region2: #{cube_forward.1} parent=1 // pred_check
      _
    $region3: #{cube_forward.1} parent=1 // pred_check_branch
      %11 = sbr.rel (0) target = $region5
    $region4: #{cube_forward.1} parent=1 // pred_region
      _
    $region5: #{cube_forward.1} parent=1 // pred_fallthru
      _
    // Predicated region
    $region6: #{cube_forward.1} parent=1 // pred_check
      _
    $region7: #{cube_forward.1} parent=1 // pred_check_branch
      %13 = sbr.rel (0) target = $region9
    $region8: #{cube_forward.1} parent=1 // pred_region
      %s15 = ssub.s32 1152, 1152
      %16 = vsyncadd [#allocation3], %s15
      %s17 = sshll.u32 [#allocation2], 4
      %s18 = int_to_ptr.vmem [resolvable:$true] %s17
      %23 = dma.hbm_to_vmem [thread:$0]  %s1, 1152, %s18, [#allocation3], 128, 128, 8
    $region9: #{cube_forward.1} parent=1 // pred_fallthru
      _
    // Predicated region
    $region10: #{cube_forward.1} parent=1 // pred_check
      _
    $region11: #{cube_forward.1} parent=1 // pred_check_branch
      %25 = sbr.rel (0) target = $region13
    $region12: #{cube_forward.1} parent=1 // pred_region
      _
    $region13: #{cube_forward.1} parent=1 // pred_fallthru
      _
    // Predicated region
    $region14: #{cube_forward.1} parent=1 // pred_check
      _
    $region15: #{cube_forward.1} parent=1 // pred_check_branch
      %27 = sbr.rel (0) target = $region17
    $region16: #{cube_forward.1} parent=1 // pred_region
      %28 = dma.done [#allocation3], 1152
    $region17: #{cube_forward.1} parent=1 // pred_fallthru
      _
    %v29 = vld [vmem:[%s0] sm:$0xff]
    %v30 = vld [vmem:[#allocation2] sm:$0xff]
    %v31 = vld [vmem:[#allocation2 + $0x8] sm:$0xff]
    %v32 = vld [vmem:[#allocation2 + $0x10] sm:$0xff]
    %v33 = vld [vmem:[#allocation2 + $0x18] sm:$0xff]
    %v34 = vld [vmem:[#allocation2 + $0x20] sm:$0xff]
    %v35 = vld [vmem:[#allocation2 + $0x28] sm:$0xff]
    %v36 = vld [vmem:[#allocation2 + $0x30] sm:$0xff]
    %v37 = vld [vmem:[#allocation2 + $0x38] sm:$0xff]
    %v38 = vld [vmem:[#allocation2 + $0x40] sm:$0xff]
    %v39 = vld [vmem:[%s2] sm:$0x1]
    %v41 = vlaneseq
    %v42 = vshrl.u32 %v41, 7
    %v43 = vsub.s32 0, %v42
    %v44 = vrot.slane %v39, %v43
    %vm46 = vcmask 588800
    %v48 = vsel %vm46, %v29, 0
    %50 = vmatprep.subr.mxu0 0.0
    %51 = vmatpush1.msra.mxu0 %v30
    %52 = vmatprep.subr.mxu0 0.0
    %53 = vmatpush1.msra.mxu0 %v31
    %54 = vmatprep.subr.mxu0 0.0
    %55 = vmatpush1.msra.mxu0 %v32
    %56 = vmatprep.subr.mxu0 0.0
    %57 = vmatpush1.msra.mxu0 %v33
    %58 = vmatprep.subr.mxu0 0.0
    %59 = vmatpush1.msra.mxu0 %v34
    %60 = vmatprep.subr.mxu0 0.0
    %61 = vmatpush1.msra.mxu0 %v35
    %62 = vmatprep.subr.mxu0 0.0
    %63 = vmatpush1.msra.mxu0 %v36
    %64 = vmatprep.subr.mxu0 0.0
    %65 = vmatpush1.msra.mxu0 %v37
    %66 = vmatprep.subr.mxu0 0.0
    %67 = vmatpush1.msra.mxu0 %v38
    %68 = vmatprep.subr.mxu0 0.0
    %69 = vmatpush1.msra.mxu0 0.0
    %70 = vmatprep.subr.mxu0 0.0
    %71 = vmatpush1.msra.mxu0 0.0
    %72 = vmatprep.subr.mxu0 0.0
    %73 = vmatpush1.msra.mxu0 0.0
    %74 = vmatprep.subr.mxu0 0.0
    %75 = vmatpush1.msra.mxu0 0.0
    %76 = vmatprep.subr.mxu0 0.0
    %77 = vmatpush1.msra.mxu0 0.0
    %78 = vmatprep.subr.mxu0 0.0
    %79 = vmatpush1.msra.mxu0 0.0
    %80 = vmatprep.subr.mxu0 0.0
    %81 = vmatpush1.msra.mxu0 0.0
    %82 = vmatprep.subr.mxu0 0.0
    %83 = vmatpush1.msra.mxu0 0.0
    %84 = vmatprep.subr.mxu0 0.0
    %85 = vmatpush1.msra.mxu0 0.0
    %86 = vmatprep.subr.mxu0 0.0
    %87 = vmatpush1.msra.mxu0 0.0
    %88 = vmatprep.subr.mxu0 0.0
    %89 = vmatpush1.msra.mxu0 0.0
    %90 = vmatprep.subr.mxu0 0.0
    %91 = vmatpush1.msra.mxu0 0.0
    %92 = vmatprep.subr.mxu0 0.0
    %93 = vmatpush1.msra.mxu0 0.0
    %94 = vmatprep.subr.mxu0 0.0
    %95 = vmatpush1.msra.mxu0 0.0
    %96 = vmatprep.subr.mxu0 0.0
    %97 = vmatpush1.msra.mxu0 0.0
    %98 = vmatprep.subr.mxu0 0.0
    %99 = vmatpush1.msra.mxu0 0.0
    %100 = vmatprep.subr.mxu0 0.0
    %101 = vmatpush1.msra.mxu0 0.0
    %102 = vmatprep.subr.mxu0 0.0
    %103 = vmatpush1.msra.mxu0 0.0
    %104 = vmatprep.subr.mxu0 0.0
    %105 = vmatpush1.msra.mxu0 0.0
    %106 = vmatprep.subr.mxu0 0.0
    %107 = vmatpush1.msra.mxu0 0.0
    %108 = vmatprep.subr.mxu0 0.0
    %109 = vmatpush1.msra.mxu0 0.0
    %110 = vmatprep.subr.mxu0 0.0
    %111 = vmatpush1.msra.mxu0 0.0
    %112 = vmatprep.subr.mxu0 0.0
    %113 = vmatpush1.msra.mxu0 0.0
    %114 = vmatprep.mubr.f32.mxu0 0.0
    %115 = vmatmul.mubr.f32.gmra.mrb[0].mxu0 %v48
    %v116 = vpop.f32.mrb[0].mxu0
    %v117 = vadd.f32 %v44, %v116
    %v118 = vpop.f32.mrb[0].mxu0
    %119 = vdwg.mxu0
    %v120 = vmul.f32 %v117, %v117
    %v121 = vmul.f32 %v120, %v117
    %122 = vst [vmem:[#allocation5] sm:$0xff] %v121
    // Predicated region
    $region18: #{cube_forward.1} parent=1 // pred_check
      _
    $region19: #{cube_forward.1} parent=1 // pred_check_branch
      %124 = sbr.rel (0) target = $region21
    $region20: #{cube_forward.1} parent=1 // pred_region
      %s126 = ssub.s32 128, 128
      %127 = vsyncadd [#allocation4], %s126
      %s129 = sshll.u32 [#allocation5], 4
      %s130 = int_to_ptr.vmem [resolvable:$true] %s129
      %132 = dma.vmem_to_hbm [thread:$0]  %s130, 128, %s3, [#allocation4]
    $region21: #{cube_forward.1} parent=1 // pred_fallthru
      _
    // Predicated region
    $region22: #{cube_forward.1} parent=1 // pred_check
      _
    $region23: #{cube_forward.1} parent=1 // pred_check_branch
      %134 = sbr.rel (0) target = $region25
    $region24: #{cube_forward.1} parent=1 // pred_region
      %135 = dma.done [#allocation4], 128
    $region25: #{cube_forward.1} parent=1 // pred_fallthru
      _
    %136 = vsyncpa [#allocation3], 1
    %137 = vsyncpa [#allocation4], 1

</llo_original>
